<compile_context>
chip_gen: v7x
topology: tpu7x:2x2x1
jax: 0.10.0
libtpu: 0.0.40
codegen_flags: <defaults>
</compile_context>

<pallas_src>
import functools

import jax
import jax.numpy as jnp
from jax import lax
from jax.experimental import pallas as pl
from jax.experimental.pallas import tpu as pltpu


def symexp(x):
    return jnp.sign(x) * (jnp.exp(jnp.abs(x)) - 1.0)


def dyna_pred_kernel(
    # inputs
    z_ref, h_ref, h1_ref, noise_ref, w_ref, aux_ref,
    # outputs
    out_ref,
    # scratch
    x_scratch,
    *, num_codes, num_latents, bins, hd, unimix, temperature,
):
    BB = out_ref.shape[0]
    C = num_codes
    L = num_latents
    LC = L * C
    R = h_ref.shape[-1]
    Z = z_ref.shape[-1]

    # ---- pack x0 = [h1 | z | h] (width 128) into VMEM scratch --------------
    x_scratch[:, 0:R] = h1_ref[...]
    x_scratch[:, R:R + Z] = z_ref[...]
    x_scratch[:, R + Z:R + Z + R] = h_ref[...]
    x0 = x_scratch[...]                                    # (BB, 128)

    # ---- 4 block-diagonal packed matmuls (dyn | cont | rew fused) ----------
    y = jnp.maximum(
        jnp.dot(x0, w_ref[0:128, :], preferred_element_type=jnp.float32)
        + aux_ref[0:1, :], 0.0)
    y = jnp.maximum(
        jnp.dot(y, w_ref[128:256, :], preferred_element_type=jnp.float32)
        + aux_ref[1:2, :], 0.0)
    y2 = (jnp.dot(y, w_ref[256:384, :], preferred_element_type=jnp.float32)
          + aux_ref[2:3, :])
    # y2 columns: [0:hd) dyn hidden (pre-ReLU) | hd: cont output |
    #             [hd+1, hd+1+bins): reward logits | rest exact zeros
    ct_probs = y2[:, hd:hd + 1]                             # raw, no sigmoid
    rt_logits = y2[:, hd + 1:hd + 1 + bins]
    zt_logits = (jnp.dot(jnp.maximum(y2, 0.0), w_ref[384:512, :],
                         preferred_element_type=jnp.float32)
                 + aux_ref[3:4, :])                         # cols [0, LC) valid

    # ---- precomputed uniforms (one lane-dense slab; no HBM per-noise DMAs) --
    u_g = jnp.maximum(noise_ref[:, 0:LC], 1e-9)             # Gumbel source
    u_c = noise_ref[:, LC:LC + 1]                           # continue uniform
    gumbel = -jnp.log(-jnp.log(u_g))

    # ---- straight-through gumbel-softmax per latent (hard one-hot) ---------
    # TODO(synk): pallas_call is not auto-differentiable; forward value equals
    # the hard one-hot. A jax.custom_vjp wrapper is needed for gradients.
    iota = lax.broadcasted_iota(jnp.int32, (BB, C), 1)      # hoisted (no CSE)
    inv_t = 1.0 / temperature
    for l in range(L):
        sl = slice(l * C, (l + 1) * C)
        blk = zt_logits[:, sl]
        m = jnp.max(blk, axis=-1, keepdims=True)
        e = jnp.exp(blk - m)
        learned = e / jnp.sum(e, axis=-1, keepdims=True)
        mixture = (1.0 - unimix) * learned + (unimix / C)
        lg = (jnp.log(mixture) + gumbel[:, sl]) * inv_t
        mx = jnp.max(lg, axis=-1, keepdims=True)
        idx = jnp.min(jnp.where(lg == mx, iota, C), axis=-1, keepdims=True)
        out_ref[:, sl] = (iota == idx).astype(jnp.float32)

    # ---- reward / continue heads -------------------------------------------
    rm = jnp.max(rt_logits, axis=-1, keepdims=True)
    re = jnp.exp(rt_logits - rm)
    rtp = re / jnp.sum(re, axis=-1, keepdims=True)
    bc = aux_ref[4:5, 0:bins]
    # TODO(synk): PyTorch computes r_hat in float64; TPU kernel uses float32.
    rhat = jnp.sum(rtp * bc, axis=-1, keepdims=True)
    # As in the reference forward: u <= raw ContinuePredictor output.
    cont = (u_c <= ct_probs).astype(jnp.float32)

    # single lane-packed output slab: [zt | rtp | cont | rhat | ctp | 0-pad]
    out_ref[:, LC:LC + bins] = rtp
    out_ref[:, LC + bins:LC + bins + 1] = cont
    out_ref[:, LC + bins + 1:LC + bins + 2] = rhat
    out_ref[:, LC + bins + 2:LC + bins + 3] = ct_probs
    pad = 128 - (LC + bins + 3)
    if pad:
        out_ref[:, LC + bins + 3:] = jnp.zeros((BB, pad), jnp.float32)


def init_params(key, zt_size, R, C, L, bins, hidden_dyn=32, hidden_cont=32,
                hidden_rew=64):
    def lin(k, fan_in, fan_out):
        kw, kb = jax.random.split(k)
        bound = float(fan_in) ** -0.5
        w = jax.random.uniform(kw, (fan_in, fan_out), jnp.float32, -bound, bound)
        b = jax.random.uniform(kb, (1, fan_out), jnp.float32, -bound, bound)
        return w, b

    keys = jax.random.split(key, 7)
    dW0, db0 = lin(keys[0], R, hidden_dyn)
    dW1, db1 = lin(keys[1], hidden_dyn, hidden_dyn)
    dW2, db2 = lin(keys[2], hidden_dyn, hidden_dyn)
    dW3, db3 = lin(keys[3], hidden_dyn, C * L)
    cW0, cb0 = lin(keys[4], zt_size + R, hidden_cont)
    cW1, cb1 = lin(keys[5], hidden_cont, hidden_cont)
    cW2, cb2 = lin(keys[6], hidden_cont, 1)
    # RewardPredictor is explicitly zero-initialized in DynaPred.__init__.
    rW0 = jnp.zeros((zt_size + R, hidden_rew), jnp.float32)
    rb0 = jnp.zeros((1, hidden_rew), jnp.float32)
    rW1 = jnp.zeros((hidden_rew, hidden_rew), jnp.float32)
    rb1 = jnp.zeros((1, hidden_rew), jnp.float32)
    rW2 = jnp.zeros((hidden_rew, bins), jnp.float32)
    rb2 = jnp.zeros((1, bins), jnp.float32)
    return [dW0, db0, dW1, db1, dW2, db2, dW3, db3,
            cW0, cb0, cW1, cb1, cW2, cb2,
            rW0, rb0, rW1, rb1, rW2, rb2]


def pack_params(params, bin_centers, zt_size, recurrent_size, num_codes,
                num_latents, bin_numbers):
    """Pack the 3 MLPs into block-diagonal 128-wide slabs (done once, host-side)."""
    (dW0, db0, dW1, db1, dW2, db2, dW3, db3,
     cW0, cb0, cW1, cb1, cW2, cb2,
     rW0, rb0, rW1, rb1, rW2, rb2) = params
    R, Z = recurrent_size, zt_size
    LC = num_codes * num_latents
    bins = bin_numbers
    HD, HC, HR = dW0.shape[1], cW0.shape[1], rW0.shape[1]
    assert HD + HC + HR == 128, "packed hidden width must be 128"
    assert R + Z + R == 128, "packed input width [h1|z|h] must be 128"
    assert HD + 1 + bins <= 128 and LC <= 128

    f32 = jnp.float32
    # layer 0: x0 = [h1 (0:R) | z,h = s (R:128)]
    W0 = jnp.zeros((128, 128), f32)
    W0 = W0.at[0:R, 0:HD].set(dW0)
    W0 = W0.at[R:128, HD:HD + HC].set(cW0)
    W0 = W0.at[R:128, HD + HC:128].set(rW0)
    # layer 1: block-diagonal hidden->hidden
    W1 = jnp.zeros((128, 128), f32)
    W1 = W1.at[0:HD, 0:HD].set(dW1)
    W1 = W1.at[HD:HD + HC, HD:HD + HC].set(cW1)
    W1 = W1.at[HD + HC:128, HD + HC:128].set(rW1)
    # layer 2: dyn hidden3 | cont output (1) | reward output (bins)
    W2 = jnp.zeros((128, 128), f32)
    W2 = W2.at[0:HD, 0:HD].set(dW2)
    W2 = W2.at[HD:HD + HC, HD:HD + 1].set(cW2)
    W2 = W2.at[HD + HC:128, HD + 1:HD + 1 + bins].set(rW2)
    # layer 3: dyn final (only rows 0:HD non-zero, cols 0:LC valid)
    W3 = jnp.zeros((128, 128), f32)
    W3 = W3.at[0:HD, 0:LC].set(dW3)
    w_slab = jnp.concatenate([W0, W1, W2, W3], axis=0)      # (512, 128)

    aux = jnp.zeros((8, 128), f32)
    aux = aux.at[0, 0:HD].set(db0[0]).at[0, HD:HD + HC].set(cb0[0]) \
             .at[0, HD + HC:128].set(rb0[0])
    aux = aux.at[1, 0:HD].set(db1[0]).at[1, HD:HD + HC].set(cb1[0]) \
             .at[1, HD + HC:128].set(rb1[0])
    aux = aux.at[2, 0:HD].set(db2[0]).at[2, HD:HD + 1].set(cb2[0]) \
             .at[2, HD + 1:HD + 1 + bins].set(rb2[0])
    aux = aux.at[3, 0:LC].set(db3[0])
    aux = aux.at[4, 0:bins].set(bin_centers.astype(f32).reshape(bins))
    return w_slab, aux


def dyna_pred_forward(z, h, h1, w_slab, aux_slab, noise_key, *,
                      num_codes, num_latents, bin_numbers,
                      hidden_dyn=32, unimix=0.01, temperature=1.0):
    B, R = h.shape
    zt_size = z.shape[-1]
    LC = num_codes * num_latents
    bins = bin_numbers
    assert R + zt_size + R == 128, "packed input width must be 128"
    assert LC + bins + 3 <= 128, "packed output must fit in 128 lanes"

    # One lane-dense (B, 128) uniform slab: cols [0,LC) gumbel source,
    # col LC continue uniform.  Distribution-equivalent to torch RNG.
    noise = jax.random.uniform(noise_key, (B, 128), jnp.float32)

    # Batch-block grid: weights stay VMEM-resident (constant index_map) while
    # batch (or rollout timesteps folded into batch) streams through.
    BLOCK_B = B if B <= 256 else 256
    grid = (pl.cdiv(B, BLOCK_B),)

    kernel = functools.partial(
        dyna_pred_kernel,
        num_codes=num_codes, num_latents=num_latents, bins=bins,
        hd=hidden_dyn, unimix=unimix, temperature=temperature)

    packed = pl.pallas_call(
        kernel,
        out_shape=jax.ShapeDtypeStruct((B, 128), jnp.float32),
        grid=grid,
        in_specs=[
            pl.BlockSpec((BLOCK_B, zt_size), lambda i: (i, 0)),
            pl.BlockSpec((BLOCK_B, R), lambda i: (i, 0)),
            pl.BlockSpec((BLOCK_B, R), lambda i: (i, 0)),
            pl.BlockSpec((BLOCK_B, 128), lambda i: (i, 0)),   # noise slab
            pl.BlockSpec((512, 128), lambda i: (0, 0)),       # resident W
            pl.BlockSpec((8, 128), lambda i: (0, 0)),         # resident b/bins
        ],
        out_specs=pl.BlockSpec((BLOCK_B, 128), lambda i: (i, 0)),
        scratch_shapes=[pltpu.VMEM((BLOCK_B, 128), jnp.float32)],
        compiler_params=pltpu.CompilerParams(
            dimension_semantics=("parallel",)),
    )(z, h, h1, noise, w_slab, aux_slab)

    zt = packed[:, :LC]
    rtp = packed[:, LC:LC + bins]
    cont = packed[:, LC + bins:LC + bins + 1].astype(jnp.int32)
    r_hat = packed[:, LC + bins + 1]
    ct_probs = packed[:, LC + bins + 2:LC + bins + 3]
    # Default Decoder(): is_image=False, is_vect=False => both outputs None.
    recon_img, recon_vect = None, None
    # TODO(synk): probs=True branch (returning learned_probs) not wired out.
    return zt, cont, r_hat, rtp, ct_probs, recon_img, recon_vect


if __name__ == "__main__":
    # Small shapes consistent with the module's forward.
    B = 2
    recurrent_size = 32
    num_codes = 16
    num_latents = 4
    zt_size = num_codes * num_latents   # 64
    bin_numbers = 16
    bin_start, bin_end = -2.0, 2.0

    key = jax.random.PRNGKey(0)
    kz, kh, kh1, kp, kn = jax.random.split(key, 5)

    z = jax.random.normal(kz, (B, zt_size), jnp.float32)
    h = jax.random.normal(kh, (B, recurrent_size), jnp.float32)
    h1 = jax.random.normal(kh1, (B, recurrent_size), jnp.float32)

    params = init_params(kp, zt_size, recurrent_size, num_codes, num_latents,
                         bin_numbers)
    bin_centers = symexp(jnp.linspace(bin_start, bin_end, bin_numbers))
    w_slab, aux_slab = pack_params(params, bin_centers, zt_size,
                                   recurrent_size, num_codes, num_latents,
                                   bin_numbers)

    outs = dyna_pred_forward(
        z, h, h1, w_slab, aux_slab, kn,
        num_codes=num_codes, num_latents=num_latents, bin_numbers=bin_numbers,
        unimix=0.01, temperature=1.0,
    )
    jax.block_until_ready([o for o in outs if o is not None])
    print("KERNEL_OK")
</pallas_src>

<mosaic_0001>
module attributes {stable_mosaic.version = 11 : i64} {
  func.func @dyna_pred_kernel(%arg0: i32, %arg1: memref<2x64xf32, #tpu.memory_space<vmem>>, %arg2: memref<2x32xf32, #tpu.memory_space<vmem>>, %arg3: memref<2x32xf32, #tpu.memory_space<vmem>>, %arg4: memref<2x128xf32, #tpu.memory_space<vmem>>, %arg5: memref<512x128xf32, #tpu.memory_space<vmem>>, %arg6: memref<8x128xf32, #tpu.memory_space<vmem>>, %arg7: memref<2x128xf32, #tpu.memory_space<vmem>>, %arg8: memref<2x128xf32, #tpu.memory_space<vmem>>) attributes {dimension_semantics = [#tpu.dimension_semantics<parallel>], iteration_bounds = array<i64: 1>, scalar_prefetch = 0 : i64, scratch_operands = 1 : i64, tpu.core_type = #tpu.core_type<tc>, window_params = [{transform_indices = @transform_0, window_bounds = array<i64: 2, 64>}, {transform_indices = @transform_1, window_bounds = array<i64: 2, 32>}, {transform_indices = @transform_2, window_bounds = array<i64: 2, 32>}, {transform_indices = @transform_3, window_bounds = array<i64: 2, 128>}, {pipeline_mode = #tpu.pipeline_mode<synchronous>, transform_indices = @transform_4, window_bounds = array<i64: 512, 128>}, {pipeline_mode = #tpu.pipeline_mode<synchronous>, transform_indices = @transform_5, window_bounds = array<i64: 8, 128>}, {transform_indices = @transform_6, window_bounds = array<i64: 2, 128>}]} {
    %c0 = arith.constant 0 : index
    %c0_0 = arith.constant 0 : index
    %0 = vector.load %arg3[%c0, %c0_0] : memref<2x32xf32, #tpu.memory_space<vmem>>, vector<2x32xf32>
    %c0_1 = arith.constant 0 : index
    %c0_2 = arith.constant 0 : index
    %1 = vector.load %arg8[%c0_1, %c0_2] : memref<2x128xf32, #tpu.memory_space<vmem>>, vector<2x32xf32>
    tpu.vector_store %arg8[%c0_1, %c0_2], %0 {strides = array<i32>} : memref<2x128xf32, #tpu.memory_space<vmem>>, vector<2x32xf32>,
    %c0_3 = arith.constant 0 : index
    %c0_4 = arith.constant 0 : index
    %2 = vector.load %arg1[%c0_3, %c0_4] : memref<2x64xf32, #tpu.memory_space<vmem>>, vector<2x64xf32>
    %c0_5 = arith.constant 0 : index
    %c32 = arith.constant 32 : index
    %3 = vector.load %arg8[%c0_5, %c32] : memref<2x128xf32, #tpu.memory_space<vmem>>, vector<2x64xf32>
    tpu.vector_store %arg8[%c0_5, %c32], %2 {strides = array<i32>} : memref<2x128xf32, #tpu.memory_space<vmem>>, vector<2x64xf32>,
    %c0_6 = arith.constant 0 : index
    %c0_7 = arith.constant 0 : index
    %4 = vector.load %arg2[%c0_6, %c0_7] : memref<2x32xf32, #tpu.memory_space<vmem>>, vector<2x32xf32>
    %c0_8 = arith.constant 0 : index
    %c96 = arith.constant 96 : index
    %5 = vector.load %arg8[%c0_8, %c96] : memref<2x128xf32, #tpu.memory_space<vmem>>, vector<2x32xf32>
    tpu.vector_store %arg8[%c0_8, %c96], %4 {strides = array<i32>} : memref<2x128xf32, #tpu.memory_space<vmem>>, vector<2x32xf32>,
    %c0_9 = arith.constant 0 : index
    %c0_10 = arith.constant 0 : index
    %6 = vector.load %arg8[%c0_9, %c0_10] : memref<2x128xf32, #tpu.memory_space<vmem>>, vector<2x128xf32>
    %c0_11 = arith.constant 0 : index
    %c0_12 = arith.constant 0 : index
    %7 = vector.load %arg5[%c0_11, %c0_12] : memref<512x128xf32, #tpu.memory_space<vmem>>, vector<128x128xf32>
    %cst = arith.constant dense<0.000000e+00> : vector<2x128xf32>
    %8 = tpu.matmul %6, %7, %cst {dimension_numbers = #tpu.dot_dimension_numbers<[1], [0], [0], [1], [0, 0, 1, 1], [], []>} : vector<2x128xf32>, vector<128x128xf32>, vector<2x128xf32> -> vector<2x128xf32>
    %c0_13 = arith.constant 0 : index
    %c0_14 = arith.constant 0 : index
    %9 = vector.load %arg6[%c0_13, %c0_14] : memref<8x128xf32, #tpu.memory_space<vmem>>, vector<1x128xf32>
    %10 = vector.broadcast %9 : vector<1x128xf32> to vector<2x128xf32>
    %11 = arith.addf %8, %10 : vector<2x128xf32>
    %cst_15 = arith.constant 0.000000e+00 : f32
    %12 = vector.broadcast %cst_15 : f32 to vector<2x128xf32>
    %13 = arith.maximumf %11, %12 : vector<2x128xf32>
    %c128 = arith.constant 128 : index
    %c0_16 = arith.constant 0 : index
    %14 = vector.load %arg5[%c128, %c0_16] : memref<512x128xf32, #tpu.memory_space<vmem>>, vector<128x128xf32>
    %cst_17 = arith.constant dense<0.000000e+00> : vector<2x128xf32>
    %15 = tpu.matmul %13, %14, %cst_17 {dimension_numbers = #tpu.dot_dimension_numbers<[1], [0], [0], [1], [0, 0, 1, 1], [], []>} : vector<2x128xf32>, vector<128x128xf32>, vector<2x128xf32> -> vector<2x128xf32>
    %c1 = arith.constant 1 : index
    %c0_18 = arith.constant 0 : index
    %16 = vector.load %arg6[%c1, %c0_18] : memref<8x128xf32, #tpu.memory_space<vmem>>, vector<1x128xf32>
    %17 = vector.broadcast %16 : vector<1x128xf32> to vector<2x128xf32>
    %18 = arith.addf %15, %17 : vector<2x128xf32>
    %cst_19 = arith.constant 0.000000e+00 : f32
    %19 = vector.broadcast %cst_19 : f32 to vector<2x128xf32>
    %20 = arith.maximumf %18, %19 : vector<2x128xf32>
    %c256 = arith.constant 256 : index
    %c0_20 = arith.constant 0 : index
    %21 = vector.load %arg5[%c256, %c0_20] : memref<512x128xf32, #tpu.memory_space<vmem>>, vector<128x128xf32>
    %cst_21 = arith.constant dense<0.000000e+00> : vector<2x128xf32>
    %22 = tpu.matmul %20, %21, %cst_21 {dimension_numbers = #tpu.dot_dimension_numbers<[1], [0], [0], [1], [0, 0, 1, 1], [], []>} : vector<2x128xf32>, vector<128x128xf32>, vector<2x128xf32> -> vector<2x128xf32>
    %c2 = arith.constant 2 : index
    %c0_22 = arith.constant 0 : index
    %23 = vector.load %arg6[%c2, %c0_22] : memref<8x128xf32, #tpu.memory_space<vmem>>, vector<1x128xf32>
    %24 = vector.broadcast %23 : vector<1x128xf32> to vector<2x128xf32>
    %25 = arith.addf %22, %24 : vector<2x128xf32>
    %26 = vector.extract_strided_slice %25 {offsets = [0, 32], sizes = [2, 1], strides = [1, 1]} : vector<2x128xf32> to vector<2x1xf32>
    %27 = vector.extract_strided_slice %25 {offsets = [0, 33], sizes = [2, 16], strides = [1, 1]} : vector<2x128xf32> to vector<2x16xf32>
    %cst_23 = arith.constant 0.000000e+00 : f32
    %28 = vector.broadcast %cst_23 : f32 to vector<2x128xf32>
    %29 = arith.maximumf %25, %28 : vector<2x128xf32>
    %c384 = arith.constant 384 : index
    %c0_24 = arith.constant 0 : index
    %30 = vector.load %arg5[%c384, %c0_24] : memref<512x128xf32, #tpu.memory_space<vmem>>, vector<128x128xf32>
    %cst_25 = arith.constant dense<0.000000e+00> : vector<2x128xf32>
    %31 = tpu.matmul %29, %30, %cst_25 {dimension_numbers = #tpu.dot_dimension_numbers<[1], [0], [0], [1], [0, 0, 1, 1], [], []>} : vector<2x128xf32>, vector<128x128xf32>, vector<2x128xf32> -> vector<2x128xf32>
    %c3 = arith.constant 3 : index
    %c0_26 = arith.constant 0 : index
    %32 = vector.load %arg6[%c3, %c0_26] : memref<8x128xf32, #tpu.memory_space<vmem>>, vector<1x128xf32>
    %33 = vector.broadcast %32 : vector<1x128xf32> to vector<2x128xf32>
    %34 = arith.addf %31, %33 : vector<2x128xf32>
    %c0_27 = arith.constant 0 : index
    %c0_28 = arith.constant 0 : index
    %35 = vector.load %arg4[%c0_27, %c0_28] : memref<2x128xf32, #tpu.memory_space<vmem>>, vector<2x64xf32>
    %cst_29 = arith.constant 9.99999971E-10 : f32
    %36 = vector.broadcast %cst_29 : f32 to vector<2x64xf32>
    %37 = arith.maximumf %35, %36 : vector<2x64xf32>
    %c0_30 = arith.constant 0 : index
    %c64 = arith.constant 64 : index
    %38 = vector.load %arg4[%c0_30, %c64] : memref<2x128xf32, #tpu.memory_space<vmem>>, vector<2x1xf32>
    %39 = math.log %37 : vector<2x64xf32>
    %cst_31 = arith.constant 0.000000e+00 : f32
    %40 = vector.broadcast %cst_31 : f32 to vector<2x64xf32>
    %41 = arith.subf %40, %39 : vector<2x64xf32>
    %42 = math.log %41 : vector<2x64xf32>
    %cst_32 = arith.constant 0.000000e+00 : f32
    %43 = vector.broadcast %cst_32 : f32 to vector<2x64xf32>
    %44 = arith.subf %43, %42 : vector<2x64xf32>
    %45 = tpu.iota {dimensions = array<i32: 1>} : vector<2x16xi32>
    %46 = vector.extract_strided_slice %34 {offsets = [0, 0], sizes = [2, 16], strides = [1, 1]} : vector<2x128xf32> to vector<2x16xf32>
    %cst_33 = arith.constant dense<0xFF800000> : vector<2xf32>
    %47 = vector.multi_reduction <maximumf>, %46, %cst_33 [1] : vector<2x16xf32> to vector<2xf32>
    %48 = vector.shape_cast %47 : vector<2xf32> to vector<2x1xf32>
    %49 = vector.broadcast %48 : vector<2x1xf32> to vector<2x16xf32>
    %50 = arith.subf %46, %49 : vector<2x16xf32>
    %51 = math.exp %50 : vector<2x16xf32>
    %cst_34 = arith.constant dense<0.000000e+00> : vector<2xf32>
    %52 = vector.multi_reduction <add>, %51, %cst_34 [1] : vector<2x16xf32> to vector<2xf32>
    %53 = vector.shape_cast %52 : vector<2xf32> to vector<2x1xf32>
    %54 = vector.broadcast %53 : vector<2x1xf32> to vector<2x16xf32>
    %55 = arith.divf %51, %54 : vector<2x16xf32>
    %cst_35 = arith.constant 9.900000e-01 : f32
    %56 = vector.broadcast %cst_35 : f32 to vector<2x16xf32>
    %57 = arith.mulf %56, %55 : vector<2x16xf32>
    %cst_36 = arith.constant 6.250000e-04 : f32
    %58 = vector.broadcast %cst_36 : f32 to vector<2x16xf32>
    %59 = arith.addf %57, %58 : vector<2x16xf32>
    %60 = math.log %59 : vector<2x16xf32>
    %61 = vector.extract_strided_slice %44 {offsets = [0, 0], sizes = [2, 16], strides = [1, 1]} : vector<2x64xf32> to vector<2x16xf32>
    %62 = arith.addf %60, %61 : vector<2x16xf32>
    %cst_37 = arith.constant 1.000000e+00 : f32
    %63 = vector.broadcast %cst_37 : f32 to vector<2x16xf32>
    %64 = arith.mulf %62, %63 : vector<2x16xf32>
    %cst_38 = arith.constant dense<0xFF800000> : vector<2xf32>
    %65 = vector.multi_reduction <maximumf>, %64, %cst_38 [1] : vector<2x16xf32> to vector<2xf32>
    %66 = vector.shape_cast %65 : vector<2xf32> to vector<2x1xf32>
    %67 = vector.broadcast %66 : vector<2x1xf32> to vector<2x16xf32>
    %68 = arith.cmpf oeq, %64, %67 : vector<2x16xf32>
    %c16_i32 = arith.constant 16 : i32
    %69 = vector.broadcast %c16_i32 : i32 to vector<2x16xi32>
    %70 = arith.select %68, %45, %69 : vector<2x16xi1>, vector<2x16xi32>
    %cst_39 = arith.constant dense<2147483647> : vector<2xi32>
    %71 = vector.multi_reduction <minsi>, %70, %cst_39 [1] : vector<2x16xi32> to vector<2xi32>
    %72 = vector.shape_cast %71 : vector<2xi32> to vector<2x1xi32>
    %73 = vector.broadcast %72 : vector<2x1xi32> to vector<2x16xi32>
    %74 = arith.cmpi eq, %45, %73 : vector<2x16xi32>
    %75 = arith.extui %74 : vector<2x16xi1> to vector<2x16xi32>
    %76 = arith.sitofp %75 : vector<2x16xi32> to vector<2x16xf32>
    %c0_40 = arith.constant 0 : index
    %c0_41 = arith.constant 0 : index
    %77 = vector.load %arg7[%c0_40, %c0_41] : memref<2x128xf32, #tpu.memory_space<vmem>>, vector<2x16xf32>
    tpu.vector_store %arg7[%c0_40, %c0_41], %76 {strides = array<i32>} : memref<2x128xf32, #tpu.memory_space<vmem>>, vector<2x16xf32>,
    %78 = vector.extract_strided_slice %34 {offsets = [0, 16], sizes = [2, 16], strides = [1, 1]} : vector<2x128xf32> to vector<2x16xf32>
    %cst_42 = arith.constant dense<0xFF800000> : vector<2xf32>
    %79 = vector.multi_reduction <maximumf>, %78, %cst_42 [1] : vector<2x16xf32> to vector<2xf32>
    %80 = vector.shape_cast %79 : vector<2xf32> to vector<2x1xf32>
    %81 = vector.broadcast %80 : vector<2x1xf32> to vector<2x16xf32>
    %82 = arith.subf %78, %81 : vector<2x16xf32>
    %83 = math.exp %82 : vector<2x16xf32>
    %cst_43 = arith.constant dense<0.000000e+00> : vector<2xf32>
    %84 = vector.multi_reduction <add>, %83, %cst_43 [1] : vector<2x16xf32> to vector<2xf32>
    %85 = vector.shape_cast %84 : vector<2xf32> to vector<2x1xf32>
    %86 = vector.broadcast %85 : vector<2x1xf32> to vector<2x16xf32>
    %87 = arith.divf %83, %86 : vector<2x16xf32>
    %cst_44 = arith.constant 9.900000e-01 : f32
    %88 = vector.broadcast %cst_44 : f32 to vector<2x16xf32>
    %89 = arith.mulf %88, %87 : vector<2x16xf32>
    %cst_45 = arith.constant 6.250000e-04 : f32
    %90 = vector.broadcast %cst_45 : f32 to vector<2x16xf32>
    %91 = arith.addf %89, %90 : vector<2x16xf32>
    %92 = math.log %91 : vector<2x16xf32>
    %93 = vector.extract_strided_slice %44 {offsets = [0, 16], sizes = [2, 16], strides = [1, 1]} : vector<2x64xf32> to vector<2x16xf32>
    %94 = arith.addf %92, %93 : vector<2x16xf32>
    %cst_46 = arith.constant 1.000000e+00 : f32
    %95 = vector.broadcast %cst_46 : f32 to vector<2x16xf32>
    %96 = arith.mulf %94, %95 : vector<2x16xf32>
    %cst_47 = arith.constant dense<0xFF800000> : vector<2xf32>
    %97 = vector.multi_reduction <maximumf>, %96, %cst_47 [1] : vector<2x16xf32> to vector<2xf32>
    %98 = vector.shape_cast %97 : vector<2xf32> to vector<2x1xf32>
    %99 = vector.broadcast %98 : vector<2x1xf32> to vector<2x16xf32>
    %100 = arith.cmpf oeq, %96, %99 : vector<2x16xf32>
    %c16_i32_48 = arith.constant 16 : i32
    %101 = vector.broadcast %c16_i32_48 : i32 to vector<2x16xi32>
    %102 = arith.select %100, %45, %101 : vector<2x16xi1>, vector<2x16xi32>
    %cst_49 = arith.constant dense<2147483647> : vector<2xi32>
    %103 = vector.multi_reduction <minsi>, %102, %cst_49 [1] : vector<2x16xi32> to vector<2xi32>
    %104 = vector.shape_cast %103 : vector<2xi32> to vector<2x1xi32>
    %105 = vector.broadcast %104 : vector<2x1xi32> to vector<2x16xi32>
    %106 = arith.cmpi eq, %45, %105 : vector<2x16xi32>
    %107 = arith.extui %106 : vector<2x16xi1> to vector<2x16xi32>
    %108 = arith.sitofp %107 : vector<2x16xi32> to vector<2x16xf32>
    %c0_50 = arith.constant 0 : index
    %c16 = arith.constant 16 : index
    %109 = vector.load %arg7[%c0_50, %c16] : memref<2x128xf32, #tpu.memory_space<vmem>>, vector<2x16xf32>
    tpu.vector_store %arg7[%c0_50, %c16], %108 {strides = array<i32>} : memref<2x128xf32, #tpu.memory_space<vmem>>, vector<2x16xf32>,
    %110 = vector.extract_strided_slice %34 {offsets = [0, 32], sizes = [2, 16], strides = [1, 1]} : vector<2x128xf32> to vector<2x16xf32>
    %cst_51 = arith.constant dense<0xFF800000> : vector<2xf32>
    %111 = vector.multi_reduction <maximumf>, %110, %cst_51 [1] : vector<2x16xf32> to vector<2xf32>
    %112 = vector.shape_cast %111 : vector<2xf32> to vector<2x1xf32>
    %113 = vector.broadcast %112 : vector<2x1xf32> to vector<2x16xf32>
    %114 = arith.subf %110, %113 : vector<2x16xf32>
    %115 = math.exp %114 : vector<2x16xf32>
    %cst_52 = arith.constant dense<0.000000e+00> : vector<2xf32>
    %116 = vector.multi_reduction <add>, %115, %cst_52 [1] : vector<2x16xf32> to vector<2xf32>
    %117 = vector.shape_cast %116 : vector<2xf32> to vector<2x1xf32>
    %118 = vector.broadcast %117 : vector<2x1xf32> to vector<2x16xf32>
    %119 = arith.divf %115, %118 : vector<2x16xf32>
    %cst_53 = arith.constant 9.900000e-01 : f32
    %120 = vector.broadcast %cst_53 : f32 to vector<2x16xf32>
    %121 = arith.mulf %120, %119 : vector<2x16xf32>
    %cst_54 = arith.constant 6.250000e-04 : f32
    %122 = vector.broadcast %cst_54 : f32 to vector<2x16xf32>
    %123 = arith.addf %121, %122 : vector<2x16xf32>
    %124 = math.log %123 : vector<2x16xf32>
    %125 = vector.extract_strided_slice %44 {offsets = [0, 32], sizes = [2, 16], strides = [1, 1]} : vector<2x64xf32> to vector<2x16xf32>
    %126 = arith.addf %124, %125 : vector<2x16xf32>
    %cst_55 = arith.constant 1.000000e+00 : f32
    %127 = vector.broadcast %cst_55 : f32 to vector<2x16xf32>
    %128 = arith.mulf %126, %127 : vector<2x16xf32>
    %cst_56 = arith.constant dense<0xFF800000> : vector<2xf32>
    %129 = vector.multi_reduction <maximumf>, %128, %cst_56 [1] : vector<2x16xf32> to vector<2xf32>
    %130 = vector.shape_cast %129 : vector<2xf32> to vector<2x1xf32>
    %131 = vector.broadcast %130 : vector<2x1xf32> to vector<2x16xf32>
    %132 = arith.cmpf oeq, %128, %131 : vector<2x16xf32>
    %c16_i32_57 = arith.constant 16 : i32
    %133 = vector.broadcast %c16_i32_57 : i32 to vector<2x16xi32>
    %134 = arith.select %132, %45, %133 : vector<2x16xi1>, vector<2x16xi32>
    %cst_58 = arith.constant dense<2147483647> : vector<2xi32>
    %135 = vector.multi_reduction <minsi>, %134, %cst_58 [1] : vector<2x16xi32> to vector<2xi32>
    %136 = vector.shape_cast %135 : vector<2xi32> to vector<2x1xi32>
    %137 = vector.broadcast %136 : vector<2x1xi32> to vector<2x16xi32>
    %138 = arith.cmpi eq, %45, %137 : vector<2x16xi32>
    %139 = arith.extui %138 : vector<2x16xi1> to vector<2x16xi32>
    %140 = arith.sitofp %139 : vector<2x16xi32> to vector<2x16xf32>
    %c0_59 = arith.constant 0 : index
    %c32_60 = arith.constant 32 : index
    %141 = vector.load %arg7[%c0_59, %c32_60] : memref<2x128xf32, #tpu.memory_space<vmem>>, vector<2x16xf32>
    tpu.vector_store %arg7[%c0_59, %c32_60], %140 {strides = array<i32>} : memref<2x128xf32, #tpu.memory_space<vmem>>, vector<2x16xf32>,
    %142 = vector.extract_strided_slice %34 {offsets = [0, 48], sizes = [2, 16], strides = [1, 1]} : vector<2x128xf32> to vector<2x16xf32>
    %cst_61 = arith.constant dense<0xFF800000> : vector<2xf32>
    %143 = vector.multi_reduction <maximumf>, %142, %cst_61 [1] : vector<2x16xf32> to vector<2xf32>
    %144 = vector.shape_cast %143 : vector<2xf32> to vector<2x1xf32>
    %145 = vector.broadcast %144 : vector<2x1xf32> to vector<2x16xf32>
    %146 = arith.subf %142, %145 : vector<2x16xf32>
    %147 = math.exp %146 : vector<2x16xf32>
    %cst_62 = arith.constant dense<0.000000e+00> : vector<2xf32>
    %148 = vector.multi_reduction <add>, %147, %cst_62 [1] : vector<2x16xf32> to vector<2xf32>
    %149 = vector.shape_cast %148 : vector<2xf32> to vector<2x1xf32>
    %150 = vector.broadcast %149 : vector<2x1xf32> to vector<2x16xf32>
    %151 = arith.divf %147, %150 : vector<2x16xf32>
    %cst_63 = arith.constant 9.900000e-01 : f32
    %152 = vector.broadcast %cst_63 : f32 to vector<2x16xf32>
    %153 = arith.mulf %152, %151 : vector<2x16xf32>
    %cst_64 = arith.constant 6.250000e-04 : f32
    %154 = vector.broadcast %cst_64 : f32 to vector<2x16xf32>
    %155 = arith.addf %153, %154 : vector<2x16xf32>
    %156 = math.log %155 : vector<2x16xf32>
    %157 = vector.extract_strided_slice %44 {offsets = [0, 48], sizes = [2, 16], strides = [1, 1]} : vector<2x64xf32> to vector<2x16xf32>
    %158 = arith.addf %156, %157 : vector<2x16xf32>
    %cst_65 = arith.constant 1.000000e+00 : f32
    %159 = vector.broadcast %cst_65 : f32 to vector<2x16xf32>
    %160 = arith.mulf %158, %159 : vector<2x16xf32>
    %cst_66 = arith.constant dense<0xFF800000> : vector<2xf32>
    %161 = vector.multi_reduction <maximumf>, %160, %cst_66 [1] : vector<2x16xf32> to vector<2xf32>
    %162 = vector.shape_cast %161 : vector<2xf32> to vector<2x1xf32>
    %163 = vector.broadcast %162 : vector<2x1xf32> to vector<2x16xf32>
    %164 = arith.cmpf oeq, %160, %163 : vector<2x16xf32>
    %c16_i32_67 = arith.constant 16 : i32
    %165 = vector.broadcast %c16_i32_67 : i32 to vector<2x16xi32>
    %166 = arith.select %164, %45, %165 : vector<2x16xi1>, vector<2x16xi32>
    %cst_68 = arith.constant dense<2147483647> : vector<2xi32>
    %167 = vector.multi_reduction <minsi>, %166, %cst_68 [1] : vector<2x16xi32> to vector<2xi32>
    %168 = vector.shape_cast %167 : vector<2xi32> to vector<2x1xi32>
    %169 = vector.broadcast %168 : vector<2x1xi32> to vector<2x16xi32>
    %170 = arith.cmpi eq, %45, %169 : vector<2x16xi32>
    %171 = arith.extui %170 : vector<2x16xi1> to vector<2x16xi32>
    %172 = arith.sitofp %171 : vector<2x16xi32> to vector<2x16xf32>
    %c0_69 = arith.constant 0 : index
    %c48 = arith.constant 48 : index
    %173 = vector.load %arg7[%c0_69, %c48] : memref<2x128xf32, #tpu.memory_space<vmem>>, vector<2x16xf32>
    tpu.vector_store %arg7[%c0_69, %c48], %172 {strides = array<i32>} : memref<2x128xf32, #tpu.memory_space<vmem>>, vector<2x16xf32>,
    %cst_70 = arith.constant dense<0xFF800000> : vector<2xf32>
    %174 = vector.multi_reduction <maximumf>, %27, %cst_70 [1] : vector<2x16xf32> to vector<2xf32>
    %175 = vector.shape_cast %174 : vector<2xf32> to vector<2x1xf32>
    %176 = vector.broadcast %175 : vector<2x1xf32> to vector<2x16xf32>
    %177 = arith.subf %27, %176 : vector<2x16xf32>
    %178 = math.exp %177 : vector<2x16xf32>
    %cst_71 = arith.constant dense<0.000000e+00> : vector<2xf32>
    %179 = vector.multi_reduction <add>, %178, %cst_71 [1] : vector<2x16xf32> to vector<2xf32>
    %180 = vector.shape_cast %179 : vector<2xf32> to vector<2x1xf32>
    %181 = vector.broadcast %180 : vector<2x1xf32> to vector<2x16xf32>
    %182 = arith.divf %178, %181 : vector<2x16xf32>
    %c4 = arith.constant 4 : index
    %c0_72 = arith.constant 0 : index
    %183 = vector.load %arg6[%c4, %c0_72] : memref<8x128xf32, #tpu.memory_space<vmem>>, vector<1x16xf32>
    %184 = vector.broadcast %183 : vector<1x16xf32> to vector<2x16xf32>
    %185 = arith.mulf %182, %184 : vector<2x16xf32>
    %cst_73 = arith.constant dense<0.000000e+00> : vector<2xf32>
    %186 = vector.multi_reduction <add>, %185, %cst_73 [1] : vector<2x16xf32> to vector<2xf32>
    %187 = vector.shape_cast %186 : vector<2xf32> to vector<2x1xf32>
    %188 = arith.cmpf ole, %38, %26 : vector<2x1xf32>
    %189 = arith.extui %188 : vector<2x1xi1> to vector<2x1xi32>
    %190 = arith.sitofp %189 : vector<2x1xi32> to vector<2x1xf32>
    %c0_74 = arith.constant 0 : index
    %c64_75 = arith.constant 64 : index
    %191 = vector.load %arg7[%c0_74, %c64_75] : memref<2x128xf32, #tpu.memory_space<vmem>>, vector<2x16xf32>
    tpu.vector_store %arg7[%c0_74, %c64_75], %182 {strides = array<i32>} : memref<2x128xf32, #tpu.memory_space<vmem>>, vector<2x16xf32>,
    %c0_76 = arith.constant 0 : index
    %c80 = arith.constant 80 : index
    %192 = vector.load %arg7[%c0_76, %c80] : memref<2x128xf32, #tpu.memory_space<vmem>>, vector<2x1xf32>
    tpu.vector_store %arg7[%c0_76, %c80], %190 {strides = array<i32>} : memref<2x128xf32, #tpu.memory_space<vmem>>, vector<2x1xf32>,
    %c0_77 = arith.constant 0 : index
    %c81 = arith.constant 81 : index
    %193 = vector.load %arg7[%c0_77, %c81] : memref<2x128xf32, #tpu.memory_space<vmem>>, vector<2x1xf32>
    tpu.vector_store %arg7[%c0_77, %c81], %187 {strides = array<i32>} : memref<2x128xf32, #tpu.memory_space<vmem>>, vector<2x1xf32>,
    %c0_78 = arith.constant 0 : index
    %c82 = arith.constant 82 : index
    %194 = vector.load %arg7[%c0_78, %c82] : memref<2x128xf32, #tpu.memory_space<vmem>>, vector<2x1xf32>
    tpu.vector_store %arg7[%c0_78, %c82], %26 {strides = array<i32>} : memref<2x128xf32, #tpu.memory_space<vmem>>, vector<2x1xf32>,
    %cst_79 = arith.constant 0.000000e+00 : f32
    %195 = vector.broadcast %cst_79 : f32 to vector<2x45xf32>
    %c0_80 = arith.constant 0 : index
    %c83 = arith.constant 83 : index
    %196 = vector.load %arg7[%c0_80, %c83] : memref<2x128xf32, #tpu.memory_space<vmem>>, vector<2x45xf32>
    tpu.vector_store %arg7[%c0_80, %c83], %195 {strides = array<i32>} : memref<2x128xf32, #tpu.memory_space<vmem>>, vector<2x45xf32>,
    return
  }
  func.func @transform_0(%arg0: i32) -> (i32, i32) {
    %c0_i32 = arith.constant 0 : i32
    %c0_i32_0 = arith.constant 0 : i32
    return %arg0, %c0_i32 : i32, i32
  }
  func.func @transform_1(%arg0: i32) -> (i32, i32) {
    %c0_i32 = arith.constant 0 : i32
    %c0_i32_0 = arith.constant 0 : i32
    return %arg0, %c0_i32 : i32, i32
  }
  func.func @transform_2(%arg0: i32) -> (i32, i32) {
    %c0_i32 = arith.constant 0 : i32
    %c0_i32_0 = arith.constant 0 : i32
    return %arg0, %c0_i32 : i32, i32
  }
  func.func @transform_3(%arg0: i32) -> (i32, i32) {
    %c0_i32 = arith.constant 0 : i32
    %c0_i32_0 = arith.constant 0 : i32
    return %arg0, %c0_i32 : i32, i32
  }
  func.func @transform_4(%arg0: i32) -> (i32, i32) {
    %c0_i32 = arith.constant 0 : i32
    %c0_i32_0 = arith.constant 0 : i32
    %c0_i32_1 = arith.constant 0 : i32
    return %c0_i32, %c0_i32_0 : i32, i32
  }
  func.func @transform_5(%arg0: i32) -> (i32, i32) {
    %c0_i32 = arith.constant 0 : i32
    %c0_i32_0 = arith.constant 0 : i32
    %c0_i32_1 = arith.constant 0 : i32
    return %c0_i32, %c0_i32_0 : i32, i32
  }
  func.func @transform_6(%arg0: i32) -> (i32, i32) {
    %c0_i32 = arith.constant 0 : i32
    %c0_i32_0 = arith.constant 0 : i32
    return %arg0, %c0_i32 : i32, i32
  }
}

</mosaic_0001>

<llo_original>
// kernel: tpu_custom_call.1
$region0: #{tpu_custom_call.1}
  #allocation0 [shape = 'u32[]', space=smem, size = 0x4, offset = 0x4, fixed_abs, tag = 'smem constant byte address 0x4 - core index']
  #allocation1 [shape = 'u32[144,128]{1,0:T(1,128)}', space=vmem, size = 0x12000, scoped, tag = 'internal scratch']
  #allocation2 [shape = 'f32[2,128]{1,0:T(2,128)}', space=vmem, size = 0x400, scoped, tag = 'scratch operand']
  %s0 = inlined_call_operand.hbm [shape: f32[2,64], index: 0, kind: input, shape index: {}]
  %s1 = inlined_call_operand.vmem [shape: f32[2,32], index: 1, kind: input, shape index: {}]
  %s2 = inlined_call_operand.vmem [shape: f32[2,32], index: 2, kind: input, shape index: {}]
  %s3 = inlined_call_operand.vmem [shape: f32[2,128], index: 3, kind: input, shape index: {}]
  %s4 = inlined_call_operand.hbm [shape: f32[512,128], index: 4, kind: input, shape index: {}]
  %s5 = inlined_call_operand.vmem [shape: f32[8,128], index: 5, kind: input, shape index: {}]
  %s6 = inlined_call_operand.hbm [shape: f32[2,128], index: 6, kind: output, shape index: {}]
  %s7 = sld [smem:[#allocation0]]
  $region42: #{tpu_custom_call.1} parent=0
    _
  %s9 = ssub.s32 1, %s7
  %s10 = scalar_select 0, %s9, %s7
  $region1: #{tpu_custom_call.1} parent=0
    #allocation3 [shape = 'u8[1024]{0}', space=vmem, size = 0x400, scoped, tag = 'input window, operand 0, single buffered']
    #allocation4 [shape = 's32[1]{0}', space=sflag, size = 0x4, scoped, tag = 'scoped memory for tpu_custom_call.1']
    #allocation5 [shape = 's32[1]{0}', space=sflag, size = 0x4, scoped, tag = 'scoped memory for tpu_custom_call.1']
    #allocation6 [shape = 'u8[262144]{0}', space=vmem, size = 0x40000, scoped, tag = 'input window, operand 4, single buffered']
    #allocation7 [shape = 's32[1]{0}', space=sflag, size = 0x4, scoped, tag = 'scoped memory for tpu_custom_call.1']
    #allocation8 [shape = 'u8[1024]{0}', space=vmem, size = 0x400, scoped, tag = 'output window, operand 0, single buffered']
    %11 = vsyncpa [#allocation4], 0
    %12 = vsyncpa [#allocation7], 0
    %13 = vsyncpa [#allocation5], 0
    // Predicated region
    $region2: #{tpu_custom_call.1} parent=1 // pred_check
      _
    $region3: #{tpu_custom_call.1} parent=1 // pred_check_branch
      %15 = sbr.rel (0) target = $region5
    $region4: #{tpu_custom_call.1} parent=1 // pred_region
      %s17 = ssub.s32 32, 32
      %18 = vsyncadd [#allocation4], %s17
      %s20 = sshll.u32 [#allocation3], 4
      %s21 = int_to_ptr.vmem [resolvable:$true] %s20
      %23 = dma.hbm_to_vmem [thread:$0]  %s0, 32, %s21, [#allocation4]
    $region5: #{tpu_custom_call.1} parent=1 // pred_fallthru
      _
    // Predicated region
    $region6: #{tpu_custom_call.1} parent=1 // pred_check
      _
    $region7: #{tpu_custom_call.1} parent=1 // pred_check_branch
      %25 = sbr.rel (0) target = $region9
    $region8: #{tpu_custom_call.1} parent=1 // pred_region
      _
    $region9: #{tpu_custom_call.1} parent=1 // pred_fallthru
      _
    // Predicated region
    $region10: #{tpu_custom_call.1} parent=1 // pred_check
      _
    $region11: #{tpu_custom_call.1} parent=1 // pred_check_branch
      %27 = sbr.rel (0) target = $region13
    $region12: #{tpu_custom_call.1} parent=1 // pred_region
      _
    $region13: #{tpu_custom_call.1} parent=1 // pred_fallthru
      _
    // Predicated region
    $region14: #{tpu_custom_call.1} parent=1 // pred_check
      _
    $region15: #{tpu_custom_call.1} parent=1 // pred_check_branch
      %29 = sbr.rel (0) target = $region17
    $region16: #{tpu_custom_call.1} parent=1 // pred_region
      _
    $region17: #{tpu_custom_call.1} parent=1 // pred_fallthru
      _
    // Predicated region
    $region18: #{tpu_custom_call.1} parent=1 // pred_check
      _
    $region19: #{tpu_custom_call.1} parent=1 // pred_check_branch
      %31 = sbr.rel (0) target = $region21
    $region20: #{tpu_custom_call.1} parent=1 // pred_region
      %s33 = ssub.s32 8192, 8192
      %34 = vsyncadd [#allocation7], %s33
      %s35 = sshll.u32 [#allocation6], 4
      %s36 = int_to_ptr.vmem [resolvable:$true] %s35
      %41 = dma.hbm_to_vmem [thread:$0]  %s4, 8192, %s36, [#allocation7], 128, 128, 8
    $region21: #{tpu_custom_call.1} parent=1 // pred_fallthru
      _
    // Predicated region
    $region22: #{tpu_custom_call.1} parent=1 // pred_check
      _
    $region23: #{tpu_custom_call.1} parent=1 // pred_check_branch
      %43 = sbr.rel (0) target = $region25
    $region24: #{tpu_custom_call.1} parent=1 // pred_region
      _
    $region25: #{tpu_custom_call.1} parent=1 // pred_fallthru
      _
    // Predicated region
    $region26: #{tpu_custom_call.1} parent=1 // pred_check
      _
    $region27: #{tpu_custom_call.1} parent=1 // pred_check_branch
      %45 = sbr.rel (0) target = $region29
    $region28: #{tpu_custom_call.1} parent=1 // pred_region
      %46 = dma.done [#allocation4], 32
    $region29: #{tpu_custom_call.1} parent=1 // pred_fallthru
      _
    // Predicated region
    $region30: #{tpu_custom_call.1} parent=1 // pred_check
      _
    $region31: #{tpu_custom_call.1} parent=1 // pred_check_branch
      %48 = sbr.rel (0) target = $region33
    $region32: #{tpu_custom_call.1} parent=1 // pred_region
      %49 = dma.done [#allocation7], 8192
    $region33: #{tpu_custom_call.1} parent=1 // pred_fallthru
      _
    %v50 = vld [vmem:[%s2] sm:$0x3]
    %vm51 = vcmask 254976
    %52 = vst.msk [vmem:[#allocation2] sm:$0x3] %vm51, %v50
    %v53 = vld [vmem:[#allocation3] sm:$0x3]
    %55 = vrot.lane.b32.xlu0 %v53, 32
    %v56 = vpop.permute.xlu0 %55
    %vm58 = vcmask 779520
    %59 = vst.msk [vmem:[#allocation2] sm:$0x3] %vm58, %v56
    %v60 = vld [vmem:[%s1] sm:$0x3]
    %62 = vrot.lane.b32.xlu0 %v60, 96
    %v63 = vpop.permute.xlu0 %62
    %vm65 = vcmask 1042176
    %66 = vst.msk [vmem:[#allocation2] sm:$0x3] %vm65, %v63
    %v67 = vld [vmem:[#allocation2] sm:$0x3]
    %v68 = vld [vmem:[#allocation6] sm:$0xff]
    %v69 = vld [vmem:[#allocation6 + $0x8] sm:$0xff]
    %v70 = vld [vmem:[#allocation6 + $0x10] sm:$0xff]
    %v71 = vld [vmem:[#allocation6 + $0x18] sm:$0xff]
    %v72 = vld [vmem:[#allocation6 + $0x20] sm:$0xff]
    %v73 = vld [vmem:[#allocation6 + $0x28] sm:$0xff]
    %v74 = vld [vmem:[#allocation6 + $0x30] sm:$0xff]
    %v75 = vld [vmem:[#allocation6 + $0x38] sm:$0xff]
    %v76 = vld [vmem:[#allocation6 + $0x40] sm:$0xff]
    %v77 = vld [vmem:[#allocation6 + $0x48] sm:$0xff]
    %v78 = vld [vmem:[#allocation6 + $0x50] sm:$0xff]
    %v79 = vld [vmem:[#allocation6 + $0x58] sm:$0xff]
    %v80 = vld [vmem:[#allocation6 + $0x60] sm:$0xff]
    %v81 = vld [vmem:[#allocation6 + $0x68] sm:$0xff]
    %v82 = vld [vmem:[#allocation6 + $0x70] sm:$0xff]
    %v83 = vld [vmem:[#allocation6 + $0x78] sm:$0xff]
    %v84 = vld [vmem:[%s5] sm:$0x1]
    %v85 = vlaneseq
    %v86 = vshrl.u32 %v85, 7
    %v87 = vsub.s32 0, %v86
    %v88 = vrot.slane %v84, %v87
    %89 = vmatprep.subr.mxu0 0.0
    %90 = vmatpush1.msra.mxu0 %v68
    %91 = vmatprep.subr.mxu0 0.0
    %92 = vmatpush1.msra.mxu0 %v69
    %93 = vmatprep.subr.mxu0 0.0
    %94 = vmatpush1.msra.mxu0 %v70
    %95 = vmatprep.subr.mxu0 0.0
    %96 = vmatpush1.msra.mxu0 %v71
    %97 = vmatprep.subr.mxu0 0.0
    %98 = vmatpush1.msra.mxu0 %v72
    %99 = vmatprep.subr.mxu0 0.0
    %100 = vmatpush1.msra.mxu0 %v73
    %101 = vmatprep.subr.mxu0 0.0
    %102 = vmatpush1.msra.mxu0 %v74
    %103 = vmatprep.subr.mxu0 0.0
    %104 = vmatpush1.msra.mxu0 %v75
    %105 = vmatprep.subr.mxu0 0.0
    %106 = vmatpush1.msra.mxu0 %v76
    %107 = vmatprep.subr.mxu0 0.0
    %108 = vmatpush1.msra.mxu0 %v77
    %109 = vmatprep.subr.mxu0 0.0
    %110 = vmatpush1.msra.mxu0 %v78
    %111 = vmatprep.subr.mxu0 0.0
    %112 = vmatpush1.msra.mxu0 %v79
    %113 = vmatprep.subr.mxu0 0.0
    %114 = vmatpush1.msra.mxu0 %v80
    %115 = vmatprep.subr.mxu0 0.0
    %116 = vmatpush1.msra.mxu0 %v81
    %117 = vmatprep.subr.mxu0 0.0
    %118 = vmatpush1.msra.mxu0 %v82
    %119 = vmatprep.subr.mxu0 0.0
    %120 = vmatpush1.msra.mxu0 %v83
    %121 = vmatprep.subr.mxu0 0.0
    %122 = vmatpush1.msra.mxu0 0.0
    %123 = vmatprep.subr.mxu0 0.0
    %124 = vmatpush1.msra.mxu0 0.0
    %125 = vmatprep.subr.mxu0 0.0
    %126 = vmatpush1.msra.mxu0 0.0
    %127 = vmatprep.subr.mxu0 0.0
    %128 = vmatpush1.msra.mxu0 0.0
    %129 = vmatprep.subr.mxu0 0.0
    %130 = vmatpush1.msra.mxu0 0.0
    %131 = vmatprep.subr.mxu0 0.0
    %132 = vmatpush1.msra.mxu0 0.0
    %133 = vmatprep.subr.mxu0 0.0
    %134 = vmatpush1.msra.mxu0 0.0
    %135 = vmatprep.subr.mxu0 0.0
    %136 = vmatpush1.msra.mxu0 0.0
    %137 = vmatprep.subr.mxu0 0.0
    %138 = vmatpush1.msra.mxu0 0.0
    %139 = vmatprep.subr.mxu0 0.0
    %140 = vmatpush1.msra.mxu0 0.0
    %141 = vmatprep.subr.mxu0 0.0
    %142 = vmatpush1.msra.mxu0 0.0
    %143 = vmatprep.subr.mxu0 0.0
    %144 = vmatpush1.msra.mxu0 0.0
    %145 = vmatprep.subr.mxu0 0.0
    %146 = vmatpush1.msra.mxu0 0.0
    %147 = vmatprep.subr.mxu0 0.0
    %148 = vmatpush1.msra.mxu0 0.0
    %149 = vmatprep.subr.mxu0 0.0
    %150 = vmatpush1.msra.mxu0 0.0
    %151 = vmatprep.subr.mxu0 0.0
    %152 = vmatpush1.msra.mxu0 0.0
    %153 = vmatprep.mubr.f32.mxu0 0.0
    %154 = vmatmul.mubr.f32.gmra.mrb[0].mxu0 %v67
    %v155 = vpop.f32.mrb[0].mxu0
    %v156 = vadd.f32 %v88, %v155
    %v157 = vpop.f32.mrb[0].mxu0
    %158 = vdwg.mxu0
    %v159 = vmax.f32 %v156, 0.0
    %v160 = vld [vmem:[#allocation6 + $0x80] sm:$0xff]
    %v161 = vld [vmem:[#allocation6 + $0x88] sm:$0xff]
    %v162 = vld [vmem:[#allocation6 + $0x90] sm:$0xff]
    %v163 = vld [vmem:[#allocation6 + $0x98] sm:$0xff]
    %v164 = vld [vmem:[#allocation6 + $0xa0] sm:$0xff]
    %v165 = vld [vmem:[#allocation6 + $0xa8] sm:$0xff]
    %v166 = vld [vmem:[#allocation6 + $0xb0] sm:$0xff]
    %v167 = vld [vmem:[#allocation6 + $0xb8] sm:$0xff]
    %v168 = vld [vmem:[#allocation6 + $0xc0] sm:$0xff]
    %v169 = vld [vmem:[#allocation6 + $0xc8] sm:$0xff]
    %v170 = vld [vmem:[#allocation6 + $0xd0] sm:$0xff]
    %v171 = vld [vmem:[#allocation6 + $0xd8] sm:$0xff]
    %v172 = vld [vmem:[#allocation6 + $0xe0] sm:$0xff]
    %v173 = vld [vmem:[#allocation6 + $0xe8] sm:$0xff]
    %v174 = vld [vmem:[#allocation6 + $0xf0] sm:$0xff]
    %v175 = vld [vmem:[#allocation6 + $0xf8] sm:$0xff]
    %v176 = vld [vmem:[%s5 + $0x1] sm:$0x1]
    %v177 = vlaneseq
    %v178 = vshrl.u32 %v177, 7
    %v179 = vsub.s32 0, %v178
    %v180 = vrot.slane %v176, %v179
    %181 = vmatprep.subr.mxu0 0.0
    %182 = vmatpush1.msra.mxu0 %v160
    %183 = vmatprep.subr.mxu0 0.0
    %184 = vmatpush1.msra.mxu0 %v161
    %185 = vmatprep.subr.mxu0 0.0
    %186 = vmatpush1.msra.mxu0 %v162
    %187 = vmatprep.subr.mxu0 0.0
    %188 = vmatpush1.msra.mxu0 %v163
    %189 = vmatprep.subr.mxu0 0.0
    %190 = vmatpush1.msra.mxu0 %v164
    %191 = vmatprep.subr.mxu0 0.0
    %192 = vmatpush1.msra.mxu0 %v165
    %193 = vmatprep.subr.mxu0 0.0
    %194 = vmatpush1.msra.mxu0 %v166
    %195 = vmatprep.subr.mxu0 0.0
    %196 = vmatpush1.msra.mxu0 %v167
    %197 = vmatprep.subr.mxu0 0.0
    %198 = vmatpush1.msra.mxu0 %v168
    %199 = vmatprep.subr.mxu0 0.0
    %200 = vmatpush1.msra.mxu0 %v169
    %201 = vmatprep.subr.mxu0 0.0
    %202 = vmatpush1.msra.mxu0 %v170
    %203 = vmatprep.subr.mxu0 0.0
    %204 = vmatpush1.msra.mxu0 %v171
    %205 = vmatprep.subr.mxu0 0.0
    %206 = vmatpush1.msra.mxu0 %v172
    %207 = vmatprep.subr.mxu0 0.0
    %208 = vmatpush1.msra.mxu0 %v173
    %209 = vmatprep.subr.mxu0 0.0
    %210 = vmatpush1.msra.mxu0 %v174
    %211 = vmatprep.subr.mxu0 0.0
    %212 = vmatpush1.msra.mxu0 %v175
    %213 = vmatprep.subr.mxu0 0.0
    %214 = vmatpush1.msra.mxu0 0.0
    %215 = vmatprep.subr.mxu0 0.0
    %216 = vmatpush1.msra.mxu0 0.0
    %217 = vmatprep.subr.mxu0 0.0
    %218 = vmatpush1.msra.mxu0 0.0
    %219 = vmatprep.subr.mxu0 0.0
    %220 = vmatpush1.msra.mxu0 0.0
    %221 = vmatprep.subr.mxu0 0.0
    %222 = vmatpush1.msra.mxu0 0.0
    %223 = vmatprep.subr.mxu0 0.0
    %224 = vmatpush1.msra.mxu0 0.0
    %225 = vmatprep.subr.mxu0 0.0
    %226 = vmatpush1.msra.mxu0 0.0
    %227 = vmatprep.subr.mxu0 0.0
    %228 = vmatpush1.msra.mxu0 0.0
    %229 = vmatprep.subr.mxu0 0.0
    %230 = vmatpush1.msra.mxu0 0.0
    %231 = vmatprep.subr.mxu0 0.0
    %232 = vmatpush1.msra.mxu0 0.0
    %233 = vmatprep.subr.mxu0 0.0
    %234 = vmatpush1.msra.mxu0 0.0
    %235 = vmatprep.subr.mxu0 0.0
    %236 = vmatpush1.msra.mxu0 0.0
    %237 = vmatprep.subr.mxu0 0.0
    %238 = vmatpush1.msra.mxu0 0.0
    %239 = vmatprep.subr.mxu0 0.0
    %240 = vmatpush1.msra.mxu0 0.0
    %241 = vmatprep.subr.mxu0 0.0
    %242 = vmatpush1.msra.mxu0 0.0
    %243 = vmatprep.subr.mxu0 0.0
    %244 = vmatpush1.msra.mxu0 0.0
    %245 = vmatprep.mubr.f32.mxu0 0.0
    %246 = vmatmul.mubr.f32.gmra.mrb[0].mxu0 %v159
    %v247 = vpop.f32.mrb[0].mxu0
    %v248 = vadd.f32 %v180, %v247
    %v249 = vpop.f32.mrb[0].mxu0
    %250 = vdwg.mxu0
    %v251 = vmax.f32 %v248, 0.0
    %v252 = vld [vmem:[#allocation6 + $0x100] sm:$0xff]
    %v253 = vld [vmem:[#allocation6 + $0x108] sm:$0xff]
    %v254 = vld [vmem:[#allocation6 + $0x110] sm:$0xff]
    %v255 = vld [vmem:[#allocation6 + $0x118] sm:$0xff]
    %v256 = vld [vmem:[#allocation6 + $0x120] sm:$0xff]
    %v257 = vld [vmem:[#allocation6 + $0x128] sm:$0xff]
    %v258 = vld [vmem:[#allocation6 + $0x130] sm:$0xff]
    %v259 = vld [vmem:[#allocation6 + $0x138] sm:$0xff]
    %v260 = vld [vmem:[#allocation6 + $0x140] sm:$0xff]
    %v261 = vld [vmem:[#allocation6 + $0x148] sm:$0xff]
    %v262 = vld [vmem:[#allocation6 + $0x150] sm:$0xff]
    %v263 = vld [vmem:[#allocation6 + $0x158] sm:$0xff]
    %v264 = vld [vmem:[#allocation6 + $0x160] sm:$0xff]
    %v265 = vld [vmem:[#allocation6 + $0x168] sm:$0xff]
    %v266 = vld [vmem:[#allocation6 + $0x170] sm:$0xff]
    %v267 = vld [vmem:[#allocation6 + $0x178] sm:$0xff]
    %v268 = vld [vmem:[%s5 + $0x2] sm:$0x1]
    %v269 = vlaneseq
    %v270 = vshrl.u32 %v269, 7
    %v271 = vsub.s32 0, %v270
    %v272 = vrot.slane %v268, %v271
    %273 = vmatprep.subr.mxu0 0.0
    %274 = vmatpush1.msra.mxu0 %v252
    %275 = vmatprep.subr.mxu0 0.0
    %276 = vmatpush1.msra.mxu0 %v253
    %277 = vmatprep.subr.mxu0 0.0
    %278 = vmatpush1.msra.mxu0 %v254
    %279 = vmatprep.subr.mxu0 0.0
    %280 = vmatpush1.msra.mxu0 %v255
    %281 = vmatprep.subr.mxu0 0.0
    %282 = vmatpush1.msra.mxu0 %v256
    %283 = vmatprep.subr.mxu0 0.0
    %284 = vmatpush1.msra.mxu0 %v257
    %285 = vmatprep.subr.mxu0 0.0
    %286 = vmatpush1.msra.mxu0 %v258
    %287 = vmatprep.subr.mxu0 0.0
    %288 = vmatpush1.msra.mxu0 %v259
    %289 = vmatprep.subr.mxu0 0.0
    %290 = vmatpush1.msra.mxu0 %v260
    %291 = vmatprep.subr.mxu0 0.0
    %292 = vmatpush1.msra.mxu0 %v261
    %293 = vmatprep.subr.mxu0 0.0
    %294 = vmatpush1.msra.mxu0 %v262
    %295 = vmatprep.subr.mxu0 0.0
    %296 = vmatpush1.msra.mxu0 %v263
    %297 = vmatprep.subr.mxu0 0.0
    %298 = vmatpush1.msra.mxu0 %v264
    %299 = vmatprep.subr.mxu0 0.0
    %300 = vmatpush1.msra.mxu0 %v265
    %301 = vmatprep.subr.mxu0 0.0
    %302 = vmatpush1.msra.mxu0 %v266
    %303 = vmatprep.subr.mxu0 0.0
    %304 = vmatpush1.msra.mxu0 %v267
    %305 = vmatprep.subr.mxu0 0.0
    %306 = vmatpush1.msra.mxu0 0.0
    %307 = vmatprep.subr.mxu0 0.0
    %308 = vmatpush1.msra.mxu0 0.0
    %309 = vmatprep.subr.mxu0 0.0
    %310 = vmatpush1.msra.mxu0 0.0
    %311 = vmatprep.subr.mxu0 0.0
    %312 = vmatpush1.msra.mxu0 0.0
    %313 = vmatprep.subr.mxu0 0.0
    %314 = vmatpush1.msra.mxu0 0.0
    %315 = vmatprep.subr.mxu0 0.0
    %316 = vmatpush1.msra.mxu0 0.0
    %317 = vmatprep.subr.mxu0 0.0
    %318 = vmatpush1.msra.mxu0 0.0
    %319 = vmatprep.subr.mxu0 0.0
    %320 = vmatpush1.msra.mxu0 0.0
    %321 = vmatprep.subr.mxu0 0.0
    %322 = vmatpush1.msra.mxu0 0.0
    %323 = vmatprep.subr.mxu0 0.0
    %324 = vmatpush1.msra.mxu0 0.0
    %325 = vmatprep.subr.mxu0 0.0
    %326 = vmatpush1.msra.mxu0 0.0
    %327 = vmatprep.subr.mxu0 0.0
    %328 = vmatpush1.msra.mxu0 0.0
    %329 = vmatprep.subr.mxu0 0.0
    %330 = vmatpush1.msra.mxu0 0.0
    %331 = vmatprep.subr.mxu0 0.0
    %332 = vmatpush1.msra.mxu0 0.0
    %333 = vmatprep.subr.mxu0 0.0
    %334 = vmatpush1.msra.mxu0 0.0
    %335 = vmatprep.subr.mxu0 0.0
    %336 = vmatpush1.msra.mxu0 0.0
    %337 = vmatprep.mubr.f32.mxu0 0.0
    %338 = vmatmul.mubr.f32.gmra.mrb[0].mxu0 %v251
    %v339 = vpop.f32.mrb[0].mxu0
    %v340 = vadd.f32 %v272, %v339
    %v341 = vpop.f32.mrb[0].mxu0
    %342 = vdwg.mxu0
    %v343 = vmax.f32 %v340, 0.0
    %v344 = vld [vmem:[#allocation6 + $0x180] sm:$0xff]
    %v345 = vld [vmem:[#allocation6 + $0x188] sm:$0xff]
    %v346 = vld [vmem:[#allocation6 + $0x190] sm:$0xff]
    %v347 = vld [vmem:[#allocation6 + $0x198] sm:$0xff]
    %v348 = vld [vmem:[#allocation6 + $0x1a0] sm:$0xff]
    %v349 = vld [vmem:[#allocation6 + $0x1a8] sm:$0xff]
    %v350 = vld [vmem:[#allocation6 + $0x1b0] sm:$0xff]
    %v351 = vld [vmem:[#allocation6 + $0x1b8] sm:$0xff]
    %v352 = vld [vmem:[#allocation6 + $0x1c0] sm:$0xff]
    %v353 = vld [vmem:[#allocation6 + $0x1c8] sm:$0xff]
    %v354 = vld [vmem:[#allocation6 + $0x1d0] sm:$0xff]
    %v355 = vld [vmem:[#allocation6 + $0x1d8] sm:$0xff]
    %v356 = vld [vmem:[#allocation6 + $0x1e0] sm:$0xff]
    %v357 = vld [vmem:[#allocation6 + $0x1e8] sm:$0xff]
    %v358 = vld [vmem:[#allocation6 + $0x1f0] sm:$0xff]
    %v359 = vld [vmem:[#allocation6 + $0x1f8] sm:$0xff]
    %v360 = vld [vmem:[%s5 + $0x3] sm:$0x1]
    %v361 = vlaneseq
    %v362 = vshrl.u32 %v361, 7
    %v363 = vsub.s32 0, %v362
    %v364 = vrot.slane %v360, %v363
    %365 = vmatprep.subr.mxu0 0.0
    %366 = vmatpush1.msra.mxu0 %v344
    %367 = vmatprep.subr.mxu0 0.0
    %368 = vmatpush1.msra.mxu0 %v345
    %369 = vmatprep.subr.mxu0 0.0
    %370 = vmatpush1.msra.mxu0 %v346
    %371 = vmatprep.subr.mxu0 0.0
    %372 = vmatpush1.msra.mxu0 %v347
    %373 = vmatprep.subr.mxu0 0.0
    %374 = vmatpush1.msra.mxu0 %v348
    %375 = vmatprep.subr.mxu0 0.0
    %376 = vmatpush1.msra.mxu0 %v349
    %377 = vmatprep.subr.mxu0 0.0
    %378 = vmatpush1.msra.mxu0 %v350
    %379 = vmatprep.subr.mxu0 0.0
    %380 = vmatpush1.msra.mxu0 %v351
    %381 = vmatprep.subr.mxu0 0.0
    %382 = vmatpush1.msra.mxu0 %v352
    %383 = vmatprep.subr.mxu0 0.0
    %384 = vmatpush1.msra.mxu0 %v353
    %385 = vmatprep.subr.mxu0 0.0
    %386 = vmatpush1.msra.mxu0 %v354
    %387 = vmatprep.subr.mxu0 0.0
    %388 = vmatpush1.msra.mxu0 %v355
    %389 = vmatprep.subr.mxu0 0.0
    %390 = vmatpush1.msra.mxu0 %v356
    %391 = vmatprep.subr.mxu0 0.0
    %392 = vmatpush1.msra.mxu0 %v357
    %393 = vmatprep.subr.mxu0 0.0
    %394 = vmatpush1.msra.mxu0 %v358
    %395 = vmatprep.subr.mxu0 0.0
    %396 = vmatpush1.msra.mxu0 %v359
    %397 = vmatprep.subr.mxu0 0.0
    %398 = vmatpush1.msra.mxu0 0.0
    %399 = vmatprep.subr.mxu0 0.0
    %400 = vmatpush1.msra.mxu0 0.0
    %401 = vmatprep.subr.mxu0 0.0
    %402 = vmatpush1.msra.mxu0 0.0
    %403 = vmatprep.subr.mxu0 0.0
    %404 = vmatpush1.msra.mxu0 0.0
    %405 = vmatprep.subr.mxu0 0.0
    %406 = vmatpush1.msra.mxu0 0.0
    %407 = vmatprep.subr.mxu0 0.0
    %408 = vmatpush1.msra.mxu0 0.0
    %409 = vmatprep.subr.mxu0 0.0
    %410 = vmatpush1.msra.mxu0 0.0
    %411 = vmatprep.subr.mxu0 0.0
    %412 = vmatpush1.msra.mxu0 0.0
    %413 = vmatprep.subr.mxu0 0.0
    %414 = vmatpush1.msra.mxu0 0.0
    %415 = vmatprep.subr.mxu0 0.0
    %416 = vmatpush1.msra.mxu0 0.0
    %417 = vmatprep.subr.mxu0 0.0
    %418 = vmatpush1.msra.mxu0 0.0
    %419 = vmatprep.subr.mxu0 0.0
    %420 = vmatpush1.msra.mxu0 0.0
    %421 = vmatprep.subr.mxu0 0.0
    %422 = vmatpush1.msra.mxu0 0.0
    %423 = vmatprep.subr.mxu0 0.0
    %424 = vmatpush1.msra.mxu0 0.0
    %425 = vmatprep.subr.mxu0 0.0
    %426 = vmatpush1.msra.mxu0 0.0
    %427 = vmatprep.subr.mxu0 0.0
    %428 = vmatpush1.msra.mxu0 0.0
    %429 = vmatprep.mubr.f32.mxu0 0.0
    %430 = vmatmul.mubr.f32.gmra.mrb[0].mxu0 %v343
    %v431 = vpop.f32.mrb[0].mxu0
    %v432 = vadd.f32 %v364, %v431
    %v433 = vpop.f32.mrb[0].mxu0
    %434 = vdwg.mxu0
    %v435 = vld [vmem:[%s3] sm:$0x3]
    %v436 = vmax.f32 %v435, 1e-09
    %v437 = vlog2.pop %v436
    %v438 = vmul.f32 %v437, 0.6931472
    %v439 = vsub.f32 0.0, %v438
    %v440 = vlog2.pop %v439
    %v441 = vmul.f32 %v440, 0.6931472
    %v442 = vsub.f32 0.0, %v441
    %v443 = vlaneseq
    %v444 = vand.u32 %v443, 127
    %vm445 = vcmask 123904
    %v446 = vsel %vm445, %v432, -inf
    %447 = vmax.xlane.f32.xlu0 %v446
    %v448 = vpop.xlane.xlu0 %447
    %v449 = vsub.f32 %v432, %v448
    %v450 = vmul.f32 %v449, 1.442695
    %v451 = vpow.pop %v450
    %v452 = vsel %vm445, %v451, 0.0
    %453 = vadd.xlane.f32.xlu0 %v452
    %v454 = vpop.xlane.xlu0 %453
    %v455 = vrcp.pop %v454
    %v456 = vmul.f32 %v451, %v455
    %v457 = vmul.f32 %v456, 0.99
    %v458 = vadd.f32 %v457, 0.000625
    %v459 = vlog2.pop %v458
    %v460 = vmul.f32 %v459, 0.6931472
    %v461 = vadd.f32 %v460, %v442
    %v462 = vsel %vm445, %v461, -inf
    %463 = vmax.xlane.f32.xlu0 %v462
    %v464 = vpop.xlane.xlu0 %463
    %vm465 = vcmp.eq.f32.partialorder %v461, %v464
    %v466 = vsel %vm465, %v444, 16
    %v467 = vsel %vm445, %v466, 2147483647
    %v468 = vand.u32 %v467, 65535
    %v469 = vshra.s32 %v467, 16
    %v470 = vcvt.s32.f32 %v468
    %v471 = vcvt.s32.f32 %v469
    %472 = vmin.xlane.f32.xlu0 %v471
    %v473 = vpop.xlane.xlu0 %472
    %vm474 = vcmp.eq.f32.partialorder %v471, %v473
    %v475 = vsel %vm474, %v470, inf
    %476 = vmin.xlane.f32.xlu0 %v475
    %v477 = vpop.xlane.xlu0 %476
    %v478 = vcvt.f32.s32 %v477
    %v479 = vcvt.f32.s32 %v473
    %v480 = vshll.u32 %v479, 16
    %v481 = vadd.s32 %v480, %v478
    %vm482 = vcmp.eq.s32.totalorder %v444, %v481
    %v483 = vsel %vm482, 1, 0
    %v484 = vcvt.s32.f32 %v483
    %485 = vst.msk [vmem:[#allocation8] sm:$0x3] %vm445, %v484
    %vm486 = vcmask 255104
    %v487 = vsel %vm486, %v432, -inf
    %488 = vmax.xlane.f32.xlu0 %v487
    %v489 = vpop.xlane.xlu0 %488
    %v490 = vsub.f32 %v432, %v489
    %v491 = vmul.f32 %v490, 1.442695
    %v492 = vpow.pop %v491
    %494 = vrot.lane.b32.xlu0 %v492, 112
    %v495 = vpop.permute.xlu0 %494
    %v497 = vsel %vm445, %v495, 0.0
    %498 = vadd.xlane.f32.xlu0 %v497
    %v499 = vpop.xlane.xlu0 %498
    %v500 = vrcp.pop %v499
    %v501 = vmul.f32 %v492, %v500
    %v502 = vmul.f32 %v501, 0.99
    %v503 = vadd.f32 %v502, 0.000625
    %v504 = vlog2.pop %v503
    %v505 = vmul.f32 %v504, 0.6931472
    %v506 = vadd.f32 %v505, %v442
    %v507 = vsel %vm486, %v506, -inf
    %508 = vmax.xlane.f32.xlu0 %v507
    %v509 = vpop.xlane.xlu0 %508
    %vm510 = vcmp.eq.f32.partialorder %v506, %v509
    %511 = vrot.lane.b32.xlu0 %v444, 16
    %v512 = vpop.permute.xlu0 %511
    %v513 = vsel %vm510, %v512, 16
    %v514 = vsel %vm486, %v513, 2147483647
    %v515 = vand.u32 %v514, 65535
    %v516 = vshra.s32 %v514, 16
    %v517 = vcvt.s32.f32 %v515
    %v518 = vcvt.s32.f32 %v516
    %519 = vmin.xlane.f32.xlu0 %v518
    %v520 = vpop.xlane.xlu0 %519
    %vm521 = vcmp.eq.f32.partialorder %v518, %v520
    %v522 = vsel %vm521, %v517, inf
    %523 = vmin.xlane.f32.xlu0 %v522
    %v524 = vpop.xlane.xlu0 %523
    %v525 = vcvt.f32.s32 %v524
    %v526 = vcvt.f32.s32 %v520
    %v527 = vshll.u32 %v526, 16
    %v528 = vadd.s32 %v527, %v525
    %vm529 = vcmp.eq.s32.totalorder %v444, %v528
    %v530 = vsel %vm529, 1, 0
    %v531 = vcvt.s32.f32 %v530
    %533 = vrot.lane.b32.xlu0 %v531, 16
    %v534 = vpop.permute.xlu0 %533
    %536 = vst.msk [vmem:[#allocation8] sm:$0x3] %vm486, %v534
    %vm537 = vcmask 386304
    %v538 = vsel %vm537, %v432, -inf
    %539 = vmax.xlane.f32.xlu0 %v538
    %v540 = vpop.xlane.xlu0 %539
    %v541 = vsub.f32 %v432, %v540
    %v542 = vmul.f32 %v541, 1.442695
    %v543 = vpow.pop %v542
    %545 = vrot.lane.b32.xlu0 %v543, 96
    %v546 = vpop.permute.xlu0 %545
    %v548 = vsel %vm445, %v546, 0.0
    %549 = vadd.xlane.f32.xlu0 %v548
    %v550 = vpop.xlane.xlu0 %549
    %v551 = vrcp.pop %v550
    %v552 = vmul.f32 %v543, %v551
    %v553 = vmul.f32 %v552, 0.99
    %v554 = vadd.f32 %v553, 0.000625
    %v555 = vlog2.pop %v554
    %v556 = vmul.f32 %v555, 0.6931472
    %v557 = vadd.f32 %v556, %v442
    %v558 = vsel %vm537, %v557, -inf
    %559 = vmax.xlane.f32.xlu0 %v558
    %v560 = vpop.xlane.xlu0 %559
    %vm561 = vcmp.eq.f32.partialorder %v557, %v560
    %562 = vrot.lane.b32.xlu0 %v444, 32
    %v563 = vpop.permute.xlu0 %562
    %v564 = vsel %vm561, %v563, 16
    %v565 = vsel %vm537, %v564, 2147483647
    %v566 = vand.u32 %v565, 65535
    %v567 = vshra.s32 %v565, 16
    %v568 = vcvt.s32.f32 %v566
    %v569 = vcvt.s32.f32 %v567
    %570 = vmin.xlane.f32.xlu0 %v569
    %v571 = vpop.xlane.xlu0 %570
    %vm572 = vcmp.eq.f32.partialorder %v569, %v571
    %v573 = vsel %vm572, %v568, inf
    %574 = vmin.xlane.f32.xlu0 %v573
    %v575 = vpop.xlane.xlu0 %574
    %v576 = vcvt.f32.s32 %v575
    %v577 = vcvt.f32.s32 %v571
    %v578 = vshll.u32 %v577, 16
    %v579 = vadd.s32 %v578, %v576
    %vm580 = vcmp.eq.s32.totalorder %v444, %v579
    %v581 = vsel %vm580, 1, 0
    %v582 = vcvt.s32.f32 %v581
    %584 = vrot.lane.b32.xlu0 %v582, 32
    %v585 = vpop.permute.xlu0 %584
    %587 = vst.msk [vmem:[#allocation8] sm:$0x3] %vm537, %v585
    %vm588 = vcmask 517504
    %v589 = vsel %vm588, %v432, -inf
    %590 = vmax.xlane.f32.xlu0 %v589
    %v591 = vpop.xlane.xlu0 %590
    %v592 = vsub.f32 %v432, %v591
    %v593 = vmul.f32 %v592, 1.442695
    %v594 = vpow.pop %v593
    %596 = vrot.lane.b32.xlu0 %v594, 80
    %v597 = vpop.permute.xlu0 %596
    %v599 = vsel %vm445, %v597, 0.0
    %600 = vadd.xlane.f32.xlu0 %v599
    %v601 = vpop.xlane.xlu0 %600
    %v602 = vrcp.pop %v601
    %v603 = vmul.f32 %v594, %v602
    %v604 = vmul.f32 %v603, 0.99
    %v605 = vadd.f32 %v604, 0.000625
    %v606 = vlog2.pop %v605
    %v607 = vmul.f32 %v606, 0.6931472
    %v608 = vadd.f32 %v607, %v442
    %v609 = vsel %vm588, %v608, -inf
    %610 = vmax.xlane.f32.xlu0 %v609
    %v611 = vpop.xlane.xlu0 %610
    %vm612 = vcmp.eq.f32.partialorder %v608, %v611
    %613 = vrot.lane.b32.xlu0 %v444, 48
    %v614 = vpop.permute.xlu0 %613
    %v615 = vsel %vm612, %v614, 16
    %v616 = vsel %vm588, %v615, 2147483647
    %v617 = vand.u32 %v616, 65535
    %v618 = vshra.s32 %v616, 16
    %v619 = vcvt.s32.f32 %v617
    %v620 = vcvt.s32.f32 %v618
    %621 = vmin.xlane.f32.xlu0 %v620
    %v622 = vpop.xlane.xlu0 %621
    %vm623 = vcmp.eq.f32.partialorder %v620, %v622
    %v624 = vsel %vm623, %v619, inf
    %625 = vmin.xlane.f32.xlu0 %v624
    %v626 = vpop.xlane.xlu0 %625
    %v627 = vcvt.f32.s32 %v626
    %v628 = vcvt.f32.s32 %v622
    %v629 = vshll.u32 %v628, 16
    %v630 = vadd.s32 %v629, %v627
    %vm631 = vcmp.eq.s32.totalorder %v444, %v630
    %v632 = vsel %vm631, 1, 0
    %v633 = vcvt.s32.f32 %v632
    %635 = vrot.lane.b32.xlu0 %v633, 48
    %v636 = vpop.permute.xlu0 %635
    %638 = vst.msk [vmem:[#allocation8] sm:$0x3] %vm588, %v636
    %vm639 = vcmask 394504
    %v640 = vsel %vm639, %v340, -inf
    %641 = vmax.xlane.f32.xlu0 %v640
    %v642 = vpop.xlane.xlu0 %641
    %v643 = vsub.f32 %v340, %v642
    %v644 = vmul.f32 %v643, 1.442695
    %v645 = vpow.pop %v644
    %647 = vrot.lane.b32.xlu0 %v645, 95
    %v648 = vpop.permute.xlu0 %647
    %v650 = vsel %vm445, %v648, 0.0
    %651 = vadd.xlane.f32.xlu0 %v650
    %v652 = vpop.xlane.xlu0 %651
    %v653 = vrcp.pop %v652
    %v654 = vmul.f32 %v645, %v653
    %v655 = vld [vmem:[%s5 + $0x4] sm:$0x1]
    %v656 = vlaneseq
    %v657 = vshrl.u32 %v656, 7
    %v658 = vsub.s32 0, %v657
    %v659 = vrot.slane %v655, %v658
    %661 = vrot.lane.b32.xlu0 %v659, 33
    %v662 = vpop.permute.xlu0 %661
    %v664 = vmul.f32 %v654, %v662
    %666 = vrot.lane.b32.xlu0 %v664, 95
    %v667 = vpop.permute.xlu0 %666
    %v669 = vsel %vm445, %v667, 0.0
    %670 = vadd.xlane.f32.xlu0 %v669
    %v671 = vpop.xlane.xlu0 %670
    %673 = vrot.lane.b32.xlu0 %v340, 32
    %v674 = vpop.permute.xlu0 %673
    %vm676 = vcmp.le.f32.partialorder %v435, %v674
    %v677 = vsel %vm676, 1, 0
    %v678 = vcvt.s32.f32 %v677
    %680 = vrot.lane.b32.xlu0 %v654, 31
    %v681 = vpop.permute.xlu0 %680
    %vm683 = vcmask 648704
    %684 = vst.msk [vmem:[#allocation8] sm:$0x3] %vm683, %v681
    %686 = vrot.lane.b32.xlu0 %v678, 16
    %v687 = vpop.permute.xlu0 %686
    %vm689 = vcmask 657024
    %690 = vst.msk [vmem:[#allocation8] sm:$0x3] %vm689, %v687
    %vm691 = vcmask 665224
    %692 = vst.msk [vmem:[#allocation8] sm:$0x3] %vm691, %v671
    %693 = vrot.lane.b32.xlu0 %v340, 50
    %v694 = vpop.permute.xlu0 %693
    %vm696 = vcmask 673424
    %697 = vst.msk [vmem:[#allocation8] sm:$0x3] %vm696, %v694
    %vm698 = vcmask 1042072
    %699 = vst.msk [vmem:[#allocation8] sm:$0x3] %vm698, 0.0
    // Predicated region
    $region34: #{tpu_custom_call.1} parent=1 // pred_check
      _
    $region35: #{tpu_custom_call.1} parent=1 // pred_check_branch
      %701 = sbr.rel (0) target = $region37
    $region36: #{tpu_custom_call.1} parent=1 // pred_region
      %s703 = ssub.s32 32, 32
      %704 = vsyncadd [#allocation5], %s703
      %s706 = sshll.u32 [#allocation8], 4
      %s707 = int_to_ptr.vmem [resolvable:$true] %s706
      %709 = dma.vmem_to_hbm [thread:$0]  %s707, 32, %s6, [#allocation5]
    $region37: #{tpu_custom_call.1} parent=1 // pred_fallthru
      _
    // Predicated region
    $region38: #{tpu_custom_call.1} parent=1 // pred_check
      _
    $region39: #{tpu_custom_call.1} parent=1 // pred_check_branch
      %711 = sbr.rel (0) target = $region41
    $region40: #{tpu_custom_call.1} parent=1 // pred_region
      %712 = dma.done [#allocation5], 32
    $region41: #{tpu_custom_call.1} parent=1 // pred_fallthru
      _
    %713 = vsyncpa [#allocation4], 1
    %714 = vsyncpa [#allocation7], 1
    %715 = vsyncpa [#allocation5], 1

</llo_original>
